<compile_context>
chip_gen: v5e
topology: v5e:2x2
jax: 0.10.0
libtpu: 0.0.40
codegen_flags: <defaults>
</compile_context>

<pallas_src>
import functools

import jax
import jax.numpy as jnp
from jax import lax
from jax.experimental import pallas as pl
from jax.experimental.pallas import tpu as pltpu


def _single_pass_kernel(x_ref, o_ref, *, inv_hw):
    # x_ref: (TR, HW)   o_ref: (TR, 1)
    s = jnp.sum(x_ref[...], axis=-1, keepdims=True, dtype=jnp.float32)
    o_ref[...] = (s * inv_hw).astype(o_ref.dtype)


def _chunked_kernel(x_ref, o_ref, acc_ref, *, inv_hw, hw_total, hw_chunk, mask_tail):
    # x_ref: (TR, HW_CHUNK)   o_ref: (TR, 1)   acc_ref: (TR, 1) f32 scratch
    k = pl.program_id(1)

    @pl.when(k == 0)
    def _():
        acc_ref[...] = jnp.zeros_like(acc_ref)

    x = x_ref[...]
    if mask_tail:
        # Ragged last chunk: out-of-bounds block padding is undefined, mask it.
        cols = lax.broadcasted_iota(jnp.int32, x.shape, 1) + k * hw_chunk
        xf = jnp.where(cols < hw_total, x.astype(jnp.float32), 0.0)
        partial = jnp.sum(xf, axis=-1, keepdims=True)
    else:
        partial = jnp.sum(x, axis=-1, keepdims=True, dtype=jnp.float32)
    acc_ref[...] += partial

    @pl.when(k == pl.num_programs(1) - 1)
    def _():
        o_ref[...] = (acc_ref[...] * inv_hw).astype(o_ref.dtype)


def _round_up(v, m):
    return ((v + m - 1) // m) * m


def global_avg_pool2d(x, *, tile_budget_bytes=None, vmem_limit_bytes=None,
                      interpret=False):
    """x: (N, C, H, W). Returns (N, C, 1, 1) = mean over spatial dims."""
    N, C, H, W = x.shape
    HW = H * W
    rows = N * C
    itemsize = jnp.dtype(x.dtype).itemsize
    x2 = x.reshape(rows, HW)

    # ---- generation-aware budgets (v7x: 64 MiB physical VMEM; v5e/v6e: 128) ----
    if tile_budget_bytes is None or vmem_limit_bytes is None:
        vmem_cap = 128 * 1024 * 1024
        try:
            vmem_cap = int(pltpu.get_tpu_info().vmem_capacity_bytes)
        except Exception:
            pass
        if vmem_cap <= 64 * 1024 * 1024:            # v7x-class
            default_budget, default_limit = 12 << 20, 48 << 20
        else:                                        # v5e / v6e-class
            default_budget, default_limit = 24 << 20, 96 << 20
        if tile_budget_bytes is None:
            tile_budget_bytes = default_budget
        if vmem_limit_bytes is None:
            vmem_limit_bytes = default_limit

    pack = max(8, 32 // itemsize)          # sublane packing: 8 f32, 16 bf16, 32 i8
    bytes_per_row = HW * itemsize
    min_tile_rows = min(rows, pack)

    inv_hw = 1.0 / float(HW)
    out_shape = jax.ShapeDtypeStruct((rows, 1), x.dtype)
    cost = pl.CostEstimate(
        flops=int(rows * HW),
        transcendentals=0,
        bytes_accessed=int(rows * HW * itemsize + rows * itemsize),
    )

    single_pass = min_tile_rows * bytes_per_row <= tile_budget_bytes

    if single_pass:
        if rows <= pack:
            tile_rows = rows                 # block == full array extent
        else:
            tile_rows = min(
                rows,
                max(pack, (tile_budget_bytes // bytes_per_row) // pack * pack))
            # Keep >= 4 grid steps when the problem is big enough to benefit,
            # so each TensorCore runs a real prefetch pipeline.
            if (pl.cdiv(rows, tile_rows) < 4 and tile_rows > pack
                    and rows * bytes_per_row > (4 << 20)):
                target = _round_up(-(-rows // 4), pack)
                tile_rows = max(pack, min(tile_rows, target))

        kernel = functools.partial(_single_pass_kernel, inv_hw=inv_hw)
        out = pl.pallas_call(
            kernel,
            out_shape=out_shape,
            grid_spec=pltpu.PrefetchScalarGridSpec(
                num_scalar_prefetch=0,
                grid=(pl.cdiv(rows, tile_rows),),
                in_specs=[pl.BlockSpec((tile_rows, HW), lambda i: (i, 0))],
                out_specs=pl.BlockSpec((tile_rows, 1), lambda i: (i, 0)),
            ),
            compiler_params=pltpu.CompilerParams(
                dimension_semantics=("parallel",),
                vmem_limit_bytes=vmem_limit_bytes,
            ),
            cost_estimate=cost,
            interpret=interpret,
        )(x2)
    else:
        # Large feature map: chunk the reduction (HW) axis with an f32
        # accumulator so any input size streams at HBM roofline.
        tile_rows = min(rows, pack)
        hw_chunk = max(128, (tile_budget_bytes // (tile_rows * itemsize)) // 128 * 128)
        hw_chunk = min(hw_chunk, _round_up(HW, 128))
        mask_tail = (HW % hw_chunk) != 0

        kernel = functools.partial(_chunked_kernel, inv_hw=inv_hw, hw_total=HW,
                                   hw_chunk=hw_chunk, mask_tail=mask_tail)
        out = pl.pallas_call(
            kernel,
            out_shape=out_shape,
            grid_spec=pltpu.PrefetchScalarGridSpec(
                num_scalar_prefetch=0,
                grid=(pl.cdiv(rows, tile_rows), pl.cdiv(HW, hw_chunk)),
                in_specs=[pl.BlockSpec((tile_rows, hw_chunk), lambda i, k: (i, k))],
                out_specs=pl.BlockSpec((tile_rows, 1), lambda i, k: (i, 0)),
                scratch_shapes=[pltpu.VMEM((tile_rows, 1), jnp.float32)],
            ),
            compiler_params=pltpu.CompilerParams(
                dimension_semantics=("parallel", "arbitrary"),
                vmem_limit_bytes=vmem_limit_bytes,
            ),
            cost_estimate=cost,
            interpret=interpret,
        )(x2)

    return out.reshape(N, C, 1, 1)


def global_avg_pool2d_reference(x):
    """Pure-JAX reference mirroring the PyTorch module."""
    N, C = x.shape[0], x.shape[1]
    return jnp.mean(x.reshape(N, C, -1), axis=2).reshape(N, C, 1, 1)


if __name__ == "__main__":
    key = jax.random.PRNGKey(0)

    # Module-sized example: exercises the single-pass row-tiled path.
    N, C, H, W = 2, 4, 16, 16
    x = jax.random.normal(key, (N, C, H, W), dtype=jnp.float32)
    y = jax.block_until_ready(global_avg_pool2d(x))
    y_ref = global_avg_pool2d_reference(x)
    assert y.shape == (N, C, 1, 1)
    assert jnp.allclose(y, y_ref, atol=1e-5, rtol=1e-5), "single-pass mismatch"

    # Forced-tiny budget: exercises the HW-chunked accumulator fallback path
    # (ragged row tile and ragged, masked last HW chunk).
    N2, C2, H2, W2 = 3, 5, 40, 40
    x2 = jax.random.normal(jax.random.PRNGKey(1), (N2, C2, H2, W2), dtype=jnp.float32)
    y2 = jax.block_until_ready(
        global_avg_pool2d(x2, tile_budget_bytes=32 * 1024,
                          vmem_limit_bytes=32 * 1024 * 1024))
    y2_ref = global_avg_pool2d_reference(x2)
    assert y2.shape == (N2, C2, 1, 1)
    assert jnp.allclose(y2, y2_ref, atol=1e-5, rtol=1e-5), "chunked-path mismatch"

    print("KERNEL_OK")
</pallas_src>

<mosaic_0001>
module attributes {stable_mosaic.version = 11 : i64} {
  func.func @_single_pass_kernel(%arg0: i32, %arg1: memref<8x256xf32, #tpu.memory_space<vmem>>, %arg2: memref<8x1xf32, #tpu.memory_space<vmem>>) attributes {dimension_semantics = [#tpu.dimension_semantics<parallel>], iteration_bounds = array<i64: 1>, scalar_prefetch = 0 : i64, scratch_operands = 0 : i64, tpu.core_type = #tpu.core_type<tc>, window_params = [{transform_indices = @transform_0, window_bounds = array<i64: 8, 256>}, {transform_indices = @transform_1, window_bounds = array<i64: 8, 1>}]} {
    %c0 = arith.constant 0 : index
    %c0_0 = arith.constant 0 : index
    %0 = vector.load %arg1[%c0, %c0_0] : memref<8x256xf32, #tpu.memory_space<vmem>>, vector<8x256xf32>
    %cst = arith.constant dense<0.000000e+00> : vector<8xf32>
    %1 = vector.multi_reduction <add>, %0, %cst [1] : vector<8x256xf32> to vector<8xf32>
    %2 = vector.shape_cast %1 : vector<8xf32> to vector<8x1xf32>
    %cst_1 = arith.constant 3.906250e-03 : f32
    %3 = vector.broadcast %cst_1 : f32 to vector<8x1xf32>
    %4 = arith.mulf %2, %3 : vector<8x1xf32>
    %c0_2 = arith.constant 0 : index
    %c0_3 = arith.constant 0 : index
    %5 = vector.load %arg2[%c0_2, %c0_3] : memref<8x1xf32, #tpu.memory_space<vmem>>, vector<8x1xf32>
    tpu.vector_store %arg2[%c0_2, %c0_3], %4 {strides = array<i32>} : memref<8x1xf32, #tpu.memory_space<vmem>>, vector<8x1xf32>,
    return
  }
  func.func @transform_0(%arg0: i32) -> (i32, i32) {
    %c0_i32 = arith.constant 0 : i32
    %c0_i32_0 = arith.constant 0 : i32
    return %arg0, %c0_i32 : i32, i32
  }
  func.func @transform_1(%arg0: i32) -> (i32, i32) {
    %c0_i32 = arith.constant 0 : i32
    %c0_i32_0 = arith.constant 0 : i32
    return %arg0, %c0_i32 : i32, i32
  }
}

</mosaic_0001>

<llo_original>
// kernel: tpu_custom_call.1
$region0: #{tpu_custom_call.1}
  #allocation0 [shape = 'u32[]', space=smem, size = 0x4, offset = 0x4, fixed_abs, tag = 'smem constant byte address 0x4 - core index']
  #allocation1 [shape = 'u32[72,128]{1,0:T(1,128)}', space=vmem, size = 0x9000, scoped, tag = 'internal scratch']
  %s0 = inlined_call_operand.hbm [shape: f32[8,256], index: 0, kind: input, shape index: {}]
  %s1 = inlined_call_operand.vmem [shape: f32[8,1], index: 1, kind: output, shape index: {}]
  %s2 = sld [smem:[#allocation0]]
  $region18: #{tpu_custom_call.1} parent=0
    _
  %s4 = ssub.s32 1, %s2
  %s5 = scalar_select 0, %s4, %s2
  $region1: #{tpu_custom_call.1} parent=0
    #allocation2 [shape = 'u8[8192]{0}', space=vmem, size = 0x2000, scoped, tag = 'input window, operand 0, single buffered']
    #allocation3 [shape = 's32[1]{0}', space=sflag, size = 0x4, scoped, tag = 'scoped memory for tpu_custom_call.1']
    %6 = vsyncpa [#allocation3], 0
    // Predicated region
    $region2: #{tpu_custom_call.1} parent=1 // pred_check
      _
    $region3: #{tpu_custom_call.1} parent=1 // pred_check_branch
      %8 = sbr.rel (0) target = $region5
    $region4: #{tpu_custom_call.1} parent=1 // pred_region
      %10 = vsyncadd [#allocation3], 0
      %s12 = sshll.u32 %s0, 4
      %s13 = int_to_ptr.hbm [resolvable:$true] %s12
      %s14 = sshll.u32 [#allocation2], 4
      %s15 = int_to_ptr.vmem [resolvable:$true] %s14
      %17 = dma.hbm_to_vmem [thread:$0]  %s13, 256, %s15, [#allocation3]
    $region5: #{tpu_custom_call.1} parent=1 // pred_fallthru
      _
    // Predicated region
    $region6: #{tpu_custom_call.1} parent=1 // pred_check
      _
    $region7: #{tpu_custom_call.1} parent=1 // pred_check_branch
      %19 = sbr.rel (0) target = $region9
    $region8: #{tpu_custom_call.1} parent=1 // pred_region
      %21 = dma.done [#allocation3], 256
    $region9: #{tpu_custom_call.1} parent=1 // pred_fallthru
      _
    %v22 = vld [vmem:[#allocation2] sm:$0xff]
    %v23 = vld [vmem:[#allocation2 + $0x8] sm:$0xff]
    %v24 = vadd.f32 %v22, %v23
    %25 = vadd.xlane.f32.xlu0 %v24
    %v26 = vpop.xlane.xlu0 %25
    %v27 = vmul.f32 %v26, 0.00390625
    %vm28 = vcmask 7168
    %29 = vst.msk [vmem:[%s1] sm:$0xff] %vm28, %v27
    // Predicated region
    $region10: #{tpu_custom_call.1} parent=1 // pred_check
      _
    $region11: #{tpu_custom_call.1} parent=1 // pred_check_branch
      %31 = sbr.rel (0) target = $region13
    $region12: #{tpu_custom_call.1} parent=1 // pred_region
      _
    $region13: #{tpu_custom_call.1} parent=1 // pred_fallthru
      _
    // Predicated region
    $region14: #{tpu_custom_call.1} parent=1 // pred_check
      _
    $region15: #{tpu_custom_call.1} parent=1 // pred_check_branch
      %33 = sbr.rel (0) target = $region17
    $region16: #{tpu_custom_call.1} parent=1 // pred_region
      _
    $region17: #{tpu_custom_call.1} parent=1 // pred_fallthru
      _
    %34 = vsyncpa [#allocation3], 1

</llo_original>
